<compile_context>
chip_gen: v7x
topology: tpu7x:2x2x1
jax: 0.10.0
libtpu: 0.0.40
codegen_flags: <defaults>
</compile_context>

<pallas_src>
import functools
import math

import jax
import jax.numpy as jnp
from jax import lax
from jax.experimental import pallas as pl
from jax.experimental.pallas import tpu as pltpu


# Conservative per-TensorCore VMEM budget for the kernel's working set and a cap
# for the scoped-VMEM limit we request. 48/60 MiB are safe on every generation
# (v7x has 64 MiB per TC and both TCs run this kernel via the parallel grid
# axes); on v5e/v6e (128 MiB) pass bigger tiles + vmem_limit_bytes explicitly.
_VMEM_BUDGET_BYTES = 48 * 1024 * 1024
_VMEM_LIMIT_CAP_BYTES = 60 * 1024 * 1024


def _accumulate(x_ref, w_ref, b_ref, acc_ref):
    """Bias-init at k==0, then (ts,tk) x (tn,tk)^T MXU accumulate into f32 scratch."""
    k = pl.program_id(4)

    @pl.when(k == 0)
    def _init():
        # Start the accumulator at the (broadcast) bias: added exactly once,
        # and no separate epilogue add / temp is needed.
        acc_ref[...] = jnp.broadcast_to(b_ref[...].astype(jnp.float32), acc_ref.shape)

    # Contract on the LAST dim of both operands (weight stays in the torch
    # Linear (out, in) layout -- no wrapper-side transpose HBM pass).
    acc_ref[...] += lax.dot_general(
        x_ref[...], w_ref[...],
        dimension_numbers=(((1,), (1,)), ((), ())),
        preferred_element_type=jnp.float32)


def _kernel_plain(x_ref, w_ref, b_ref, o_ref, acc_ref):
    # o_ref: (ts, tn) lane-dense slab of the (mp*B, S, out_per) output; the head
    # split/transpose is done by a cheap XLA pass in the wrapper (head_dim < 128
    # path, where in-kernel per-head stores would be masked at <=50% lanes).
    _accumulate(x_ref, w_ref, b_ref, acc_ref)

    @pl.when(pl.program_id(4) == pl.num_programs(4) - 1)
    def _epilogue():
        o_ref[...] = acc_ref[...].astype(o_ref.dtype)


def _kernel_fused_heads(x_ref, w_ref, b_ref, o_ref, acc_ref, *, head_dim, heads_per_tile):
    # o_ref: (heads_per_tile, ts, head_dim) tile of the final
    # (B, head_num, S, head_dim) layout. head_dim % 128 == 0, so the lane slices
    # below are 128-aligned and every store is a full-lane (unmasked) vst.
    _accumulate(x_ref, w_ref, b_ref, acc_ref)

    @pl.when(pl.program_id(4) == pl.num_programs(4) - 1)
    def _epilogue():
        acc = acc_ref[...]
        for h in range(heads_per_tile):                       # unrolled at trace time
            o_ref[h] = acc[:, h * head_dim:(h + 1) * head_dim].astype(o_ref.dtype)


def _pick_tile(total, target, quantum):
    """Largest multiple of `quantum` that divides `total` and is <= target;
    falls back to the full extent (always a legal block shape)."""
    cand = (min(target, total) // quantum) * quantum
    while cand >= quantum:
        if total % cand == 0:
            return cand
        cand -= quantum
    return total


def _shrink_tile(total, cur, quantum):
    """Next smaller legal tile strictly below `cur`, or None if none exists."""
    if cur <= quantum:
        return None
    nxt = _pick_tile(total, cur - quantum, quantum)
    return nxt if nxt < cur else None


def column_serial_linear_transpose(x, weight, bias, head_num_total, mp_size, *,
                                   compute_dtype=None, out_dtype=None,
                                   ts=None, tn=None, tk=None,
                                   weight_buffers=2, vmem_limit_bytes=None):
    """
    x      : (B, S, in_features)
    weight : (mp_size, out_per, in_features)   -- per-shard weights, torch Linear (out, in) layout
    bias   : (mp_size, out_per)
    returns: (B, head_num_total, S, head_dim)
    """
    B, S, in_f = x.shape
    mp, out_per, in_f_w = weight.shape
    assert mp == mp_size and in_f_w == in_f
    assert head_num_total % mp_size == 0
    head_per = head_num_total // mp_size
    assert out_per % head_per == 0
    head_dim = out_per // head_per
    out_dtype = out_dtype or x.dtype

    # Keep params/activations stored in the compute dtype (e.g. bf16): with
    # compute_dtype=None no wrapper-side cast (an extra full HBM pass over x and
    # the whole weight tensor) is emitted.
    if compute_dtype is None:
        compute_dtype = x.dtype
    xc = x if x.dtype == compute_dtype else x.astype(compute_dtype)
    wc = weight if weight.dtype == compute_dtype else weight.astype(compute_dtype)
    b2 = bias.reshape(mp, 1, out_per).astype(jnp.float32)   # tiny; added on the f32 accumulator

    # head_dim a multiple of 128 -> fuse the head transpose into the output stores;
    # otherwise emit a lane-dense slab and transpose once with XLA.
    fused_heads = (head_dim % 128 == 0)
    # TODO(synk): a bitcast-packed "two heads per 128-lane store" path for head_dim==64
    # would fuse the transpose for that case as well; the XLA-transpose fallback is used.

    x_item = jnp.dtype(xc.dtype).itemsize
    w_item = jnp.dtype(wc.dtype).itemsize
    o_item = jnp.dtype(out_dtype).itemsize
    wbuf = max(2, int(weight_buffers))

    # ---- tile selection --------------------------------------------------
    ts_q = 128 if S % 128 == 0 else 8          # 128-aligned M when S allows
    tn_q = math.lcm(head_dim, 128) if fused_heads else 128
    user_tiles = (ts is not None) or (tn is not None) or (tk is not None)
    ts = ts or _pick_tile(S, 1024, ts_q)
    tn = tn or _pick_tile(out_per, 2048, tn_q)
    tk = tk or in_f                            # single K step -> x tile resident across N

    def working_set(ts_, tn_, tk_):
        return (2 * ts_ * tk_ * x_item         # x double buffer
                + wbuf * tn_ * tk_ * w_item    # weight buffers
                + ts_ * tn_ * 4                # f32 accumulator scratch
                + 2 * ts_ * tn_ * o_item       # output double buffer
                + 2 * 2 * tn_ * 4)             # bias (negligible)

    if not user_tiles:
        # Walk the tiles down until the working set fits the per-TC VMEM budget.
        while working_set(ts, tn, tk) > _VMEM_BUDGET_BYTES:
            if tk > 512:                       # keep tk >= 512: vst work ~ 128/tk of MXU cycles
                nxt = _shrink_tile(in_f, tk, 128)
                if nxt is not None and nxt >= 512:
                    tk = nxt
                    continue
            if tn >= ts:
                nxt = _shrink_tile(out_per, tn, tn_q)
                if nxt is not None:
                    tn = nxt
                    continue
            nxt = _shrink_tile(S, ts, ts_q)
            if nxt is not None:
                ts = nxt
                continue
            nxt = _shrink_tile(out_per, tn, tn_q)
            if nxt is not None:
                tn = nxt
                continue
            nxt = _shrink_tile(in_f, tk, 128)  # last resort: allow tk below 512
            if nxt is not None:
                tk = nxt
                continue
            break  # awkward (non-divisible) extents: rely on vmem_limit below
    assert S % ts == 0 and out_per % tn == 0 and in_f % tk == 0, (ts, tn, tk)
    if fused_heads:
        assert tn % head_dim == 0

    n_tiles = out_per // tn
    k_steps = in_f // tk
    heads_per_tile = tn // head_dim if fused_heads else None
    grid = (mp, B, S // ts, n_tiles, k_steps)

    ws = working_set(ts, tn, tk)
    if vmem_limit_bytes is None:
        need = int(ws * 5 // 4) + (4 << 20)
        if need > (16 << 20):                  # may exceed the smallest default scoped limit (v5e)
            vmem_limit_bytes = min(max(need, 32 << 20), _VMEM_LIMIT_CAP_BYTES)

    # ---- specs -----------------------------------------------------------
    in_specs = [
        # activations: block depends only on (b, s, k); with k_steps == 1 the
        # block index is constant across n, so the x tile stays resident in VMEM.
        pl.BlockSpec((None, ts, tk), lambda i, b, s, n, k: (b, s, k)),
    ]
    w_index = lambda i, b, s, n, k: (i, n, k)
    if wbuf > 2:
        # Optional deeper weight pipelining (v7x HBM-jitter hiding); costs one
        # extra tn*tk weight buffer of VMEM, so default stays at 2.
        in_specs.append(pl.BlockSpec((None, tn, tk), w_index,
                                     pipeline_mode=pl.Buffered(wbuf)))
    else:
        in_specs.append(pl.BlockSpec((None, tn, tk), w_index))
    in_specs.append(pl.BlockSpec((None, 1, tn), lambda i, b, s, n, k: (i, 0, n)))  # bias

    if fused_heads:
        kernel = functools.partial(_kernel_fused_heads,
                                   head_dim=head_dim, heads_per_tile=heads_per_tile)
        out_shape = jax.ShapeDtypeStruct((B, head_num_total, S, head_dim), out_dtype)
        out_specs = pl.BlockSpec(
            (None, heads_per_tile, ts, head_dim),
            lambda i, b, s, n, k: (b, i * n_tiles + n, s, 0))
    else:
        kernel = _kernel_plain
        out_shape = jax.ShapeDtypeStruct((mp * B, S, out_per), out_dtype)
        out_specs = pl.BlockSpec((None, ts, tn),
                                 lambda i, b, s, n, k: (i * B + b, s, n))

    # Tiled HBM traffic: x read once per shard when k_steps==1 (resident across
    # n), otherwise n_tiles times; W re-fetched for every (b, s) tile.
    x_passes = mp * (1 if k_steps == 1 else n_tiles)
    w_passes = B * (S // ts)
    cost = pl.CostEstimate(
        flops=2 * mp * B * S * in_f * out_per,
        transcendentals=0,
        bytes_accessed=(x_passes * B * S * in_f * x_item
                        + w_passes * mp * out_per * in_f * w_item
                        + mp * out_per * 4
                        + B * head_num_total * S * head_dim * o_item))

    cp_kwargs = dict(dimension_semantics=("parallel", "parallel", "parallel",
                                          "parallel", "arbitrary"))
    if vmem_limit_bytes is not None:
        cp_kwargs["vmem_limit_bytes"] = int(vmem_limit_bytes)

    out = pl.pallas_call(
        kernel,
        out_shape=out_shape,
        grid_spec=pltpu.PrefetchScalarGridSpec(
            num_scalar_prefetch=0,
            grid=grid,
            in_specs=in_specs,
            out_specs=out_specs,
            scratch_shapes=[pltpu.VMEM((ts, tn), jnp.float32)]),
        compiler_params=pltpu.CompilerParams(**cp_kwargs),
        cost_estimate=cost,
    )(xc, wc, b2)

    if fused_heads:
        return out
    # head_dim < 128: one cheap XLA reshape/transpose into the final layout.
    y = out.reshape(mp, B, S, head_per, head_dim)
    y = jnp.transpose(y, (1, 0, 3, 2, 4))
    return y.reshape(B, head_num_total, S, head_dim)


def _reference(x, weight, bias, head_num_total, mp_size):
    """Pure-JAX reference mirroring the PyTorch forward."""
    B, S, _ = x.shape
    _, out_per, _ = weight.shape
    head_per = head_num_total // mp_size
    head_dim = out_per // head_per
    outs = []
    for i in range(mp_size):
        y = x @ weight[i].T + bias[i]                       # (B, S, out_per)
        y = y.reshape(B, S, head_per, head_dim)
        y = jnp.transpose(y, (0, 2, 1, 3))                  # (B, head_per, S, head_dim)
        outs.append(y)
    return jnp.concatenate(outs, axis=1)                    # (B, head_num, S, head_dim)


if __name__ == "__main__":
    key = jax.random.PRNGKey(0)

    def run_case(case_idx, B, S, in_f, out_total, head_total, mp):
        k = jax.random.fold_in(key, case_idx)
        kx, kw, kb = jax.random.split(k, 3)
        out_per = out_total // mp
        head_per = head_total // mp
        head_dim = out_per // head_per
        # Params/activations stored in bf16 (MXU feed dtype) -> no wrapper cast.
        x = jax.random.normal(kx, (B, S, in_f), dtype=jnp.float32).astype(jnp.bfloat16)
        w = (0.02 * jax.random.normal(kw, (mp, out_per, in_f), dtype=jnp.float32)
             ).astype(jnp.bfloat16)
        # Module init zeroes the bias; use a nonzero bias to exercise the
        # bias-init path of the accumulator.
        b = 0.1 * jax.random.normal(kb, (mp, out_per), dtype=jnp.float32)

        out = column_serial_linear_transpose(x, w, b, head_total, mp,
                                             out_dtype=jnp.float32)
        out = jax.block_until_ready(out)
        assert out.shape == (B, head_total, S, head_dim), out.shape

        ref = _reference(x.astype(jnp.float32), w.astype(jnp.float32), b,
                         head_total, mp)
        err = jnp.max(jnp.abs(out - ref))
        assert jnp.allclose(out, ref, atol=2e-2, rtol=2e-2), (case_idx, float(err))

    # Case 0: head_dim = 8 (< 128) -> lane-dense slab kernel + XLA transpose path.
    run_case(0, B=2, S=8, in_f=32, out_total=32, head_total=4, mp=2)
    # Case 1: head_dim = 128      -> fused head-transpose epilogue path.
    run_case(1, B=2, S=16, in_f=128, out_total=256, head_total=2, mp=1)

    print("KERNEL_OK")
</pallas_src>

<mosaic_0001>
module attributes {stable_mosaic.version = 11 : i64} {
  func.func @_kernel_plain(%arg0: i32, %arg1: i32, %arg2: i32, %arg3: i32, %arg4: i32, %arg5: memref<1x8x32xbf16, #tpu.memory_space<vmem>>, %arg6: memref<1x16x32xbf16, #tpu.memory_space<vmem>>, %arg7: memref<1x1x16xf32, #tpu.memory_space<vmem>>, %arg8: memref<1x8x16xf32, #tpu.memory_space<vmem>>, %arg9: memref<8x16xf32, #tpu.memory_space<vmem>>) attributes {dimension_semantics = [#tpu.dimension_semantics<parallel>, #tpu.dimension_semantics<parallel>, #tpu.dimension_semantics<parallel>, #tpu.dimension_semantics<parallel>, #tpu.dimension_semantics<arbitrary>], iteration_bounds = array<i64: 2, 2, 1, 1, 1>, scalar_prefetch = 0 : i64, scratch_operands = 1 : i64, tpu.core_type = #tpu.core_type<tc>, window_params = [{transform_indices = @transform_0, window_bounds = array<i64: 1, 8, 32>}, {transform_indices = @transform_1, window_bounds = array<i64: 1, 16, 32>}, {transform_indices = @transform_2, window_bounds = array<i64: 1, 1, 16>}, {transform_indices = @transform_3, window_bounds = array<i64: 1, 8, 16>}]} {
    %c0_i32 = arith.constant 0 : i32
    %0 = arith.cmpi eq, %arg4, %c0_i32 : i32
    %1 = arith.extui %0 : i1 to i32
    %c0_i32_0 = arith.constant 0 : i32
    %2 = arith.cmpi ne, %1, %c0_i32_0 : i32
    scf.if %2 {
      %c0_12 = arith.constant 0 : index
      %c0_13 = arith.constant 0 : index
      %c0_14 = arith.constant 0 : index
      %14 = vector.load %arg7[%c0_12, %c0_13, %c0_14] : memref<1x1x16xf32, #tpu.memory_space<vmem>>, vector<1x1x16xf32>
      %15 = vector.shape_cast %14 : vector<1x1x16xf32> to vector<1x16xf32>
      %16 = vector.shape_cast %15 : vector<1x16xf32> to vector<1x16xf32>
      %17 = vector.broadcast %16 : vector<1x16xf32> to vector<8x16xf32>
      %c0_15 = arith.constant 0 : index
      %c0_16 = arith.constant 0 : index
      %18 = vector.load %arg9[%c0_15, %c0_16] : memref<8x16xf32, #tpu.memory_space<vmem>>, vector<8x16xf32>
      tpu.vector_store %arg9[%c0_15, %c0_16], %17 {strides = array<i32>} : memref<8x16xf32, #tpu.memory_space<vmem>>, vector<8x16xf32>,
    } else {
    }
    %c0 = arith.constant 0 : index
    %c0_1 = arith.constant 0 : index
    %3 = vector.load %arg9[%c0, %c0_1] : memref<8x16xf32, #tpu.memory_space<vmem>>, vector<8x16xf32>
    %c0_2 = arith.constant 0 : index
    %c0_3 = arith.constant 0 : index
    %c0_4 = arith.constant 0 : index
    %4 = vector.load %arg5[%c0_2, %c0_3, %c0_4] : memref<1x8x32xbf16, #tpu.memory_space<vmem>>, vector<1x8x32xbf16>
    %5 = vector.shape_cast %4 : vector<1x8x32xbf16> to vector<8x32xbf16>
    %c0_5 = arith.constant 0 : index
    %c0_6 = arith.constant 0 : index
    %c0_7 = arith.constant 0 : index
    %6 = vector.load %arg6[%c0_5, %c0_6, %c0_7] : memref<1x16x32xbf16, #tpu.memory_space<vmem>>, vector<1x16x32xbf16>
    %7 = vector.shape_cast %6 : vector<1x16x32xbf16> to vector<16x32xbf16>
    %cst = arith.constant dense<0.000000e+00> : vector<8x16xf32>
    %8 = tpu.matmul %5, %7, %cst {dimension_numbers = #tpu.dot_dimension_numbers<[1], [1], [0], [0], [0, 0, 1, 0], [], []>} : vector<8x32xbf16>, vector<16x32xbf16>, vector<8x16xf32> -> vector<8x16xf32>
    %9 = arith.addf %3, %8 : vector<8x16xf32>
    %c0_8 = arith.constant 0 : index
    %c0_9 = arith.constant 0 : index
    %10 = vector.load %arg9[%c0_8, %c0_9] : memref<8x16xf32, #tpu.memory_space<vmem>>, vector<8x16xf32>
    tpu.vector_store %arg9[%c0_8, %c0_9], %9 {strides = array<i32>} : memref<8x16xf32, #tpu.memory_space<vmem>>, vector<8x16xf32>,
    %c0_i32_10 = arith.constant 0 : i32
    %11 = arith.cmpi eq, %arg4, %c0_i32_10 : i32
    %12 = arith.extui %11 : i1 to i32
    %c0_i32_11 = arith.constant 0 : i32
    %13 = arith.cmpi ne, %12, %c0_i32_11 : i32
    scf.if %13 {
      %c0_12 = arith.constant 0 : index
      %c0_13 = arith.constant 0 : index
      %14 = vector.load %arg9[%c0_12, %c0_13] : memref<8x16xf32, #tpu.memory_space<vmem>>, vector<8x16xf32>
      %c0_14 = arith.constant 0 : index
      %c0_15 = arith.constant 0 : index
      %c0_16 = arith.constant 0 : index
      %15 = vector.load %arg8[%c0_14, %c0_15, %c0_16] : memref<1x8x16xf32, #tpu.memory_space<vmem>>, vector<1x8x16xf32>
      %16 = vector.shape_cast %15 : vector<1x8x16xf32> to vector<8x16xf32>
      %17 = vector.shape_cast %14 : vector<8x16xf32> to vector<1x8x16xf32>
      tpu.vector_store %arg8[%c0_14, %c0_15, %c0_16], %17 {strides = array<i32>} : memref<1x8x16xf32, #tpu.memory_space<vmem>>, vector<1x8x16xf32>,
    } else {
    }
    return
  }
  func.func @transform_0(%arg0: i32, %arg1: i32, %arg2: i32, %arg3: i32, %arg4: i32) -> (i32, i32, i32) {
    %c0_i32 = arith.constant 0 : i32
    return %arg1, %arg2, %arg4 : i32, i32, i32
  }
  func.func @transform_1(%arg0: i32, %arg1: i32, %arg2: i32, %arg3: i32, %arg4: i32) -> (i32, i32, i32) {
    %c0_i32 = arith.constant 0 : i32
    return %arg0, %arg3, %arg4 : i32, i32, i32
  }
  func.func @transform_2(%arg0: i32, %arg1: i32, %arg2: i32, %arg3: i32, %arg4: i32) -> (i32, i32, i32) {
    %c0_i32 = arith.constant 0 : i32
    %c0_i32_0 = arith.constant 0 : i32
    return %arg0, %c0_i32, %arg3 : i32, i32, i32
  }
  func.func @transform_3(%arg0: i32, %arg1: i32, %arg2: i32, %arg3: i32, %arg4: i32) -> (i32, i32, i32) {
    %c2_i32 = arith.constant 2 : i32
    %0 = arith.muli %arg0, %c2_i32 : i32
    %1 = arith.addi %0, %arg1 : i32
    %c0_i32 = arith.constant 0 : i32
    return %1, %arg2, %arg3 : i32, i32, i32
  }
}

</mosaic_0001>

<llo_original>
// kernel: tpu_custom_call.1
$region0: #{tpu_custom_call.1}
  #allocation0 [shape = 'u32[]', space=smem, size = 0x4, offset = 0x4, fixed_abs, tag = 'smem constant byte address 0x4 - core index']
  #allocation1 [shape = 'u32[144,128]{1,0:T(1,128)}', space=vmem, size = 0x12000, scoped, tag = 'internal scratch']
  #allocation2 [shape = 'f32[8,16]{1,0:T(8,128)}', space=vmem, size = 0x1000, scoped, tag = 'scratch operand']
  %s0 = inlined_call_operand.hbm [shape: bf16[2,8,32], index: 0, kind: input, shape index: {}]
  %s1 = inlined_call_operand.hbm [shape: bf16[2,16,32], index: 1, kind: input, shape index: {}]
  %s2 = inlined_call_operand.vmem [shape: f32[2,1,16], index: 2, kind: input, shape index: {}]
  %s3 = inlined_call_operand.hbm [shape: f32[4,8,16], index: 3, kind: output, shape index: {}]
  %s4 = sld [smem:[#allocation0]]
  $region61: #{tpu_custom_call.1} parent=0
    _
  %s6 = ssub.s32 1, %s4
  %s7 = scalar_select 0, %s6, %s4
  $region1: #{tpu_custom_call.1} parent=0
    #allocation3 [shape = 'u8[4096]{0}', space=vmem, size = 0x1000, scoped, tag = 'input window, operand 0']
    #allocation4 [shape = 's32[2]{0}', space=sflag, size = 0x8, scoped, tag = 'scoped memory for tpu_custom_call.1']
    #allocation5 [shape = 's32[2]{0}', space=sflag, size = 0x8, scoped, tag = 'scoped memory for tpu_custom_call.1']
    #allocation6 [shape = 'u8[8192]{0}', space=vmem, size = 0x2000, scoped, tag = 'input window, operand 1']
    #allocation7 [shape = 's32[2]{0}', space=sflag, size = 0x8, scoped, tag = 'scoped memory for tpu_custom_call.1']
    #allocation8 [shape = 'u8[8192]{0}', space=vmem, size = 0x2000, scoped, tag = 'output window, operand 0']
    %8 = vsyncpa [#allocation4], 0
    %s9 = scalar_lea.sflag [#allocation4], 1
    %10 = vsyncpa %s9, 0
    %11 = vsyncpa [#allocation7], 0
    %s12 = scalar_lea.sflag [#allocation7], 1
    %13 = vsyncpa %s12, 0
    %14 = vsyncpa [#allocation5], 0
    %s15 = scalar_lea.sflag [#allocation5], 1
    %16 = vsyncpa %s15, 0
    loop: start=0, step=1, limit=6
    $region2: #{tpu_custom_call.1} parent=1 // loop_pre_header
      _
    $region3: #{tpu_custom_call.1} parent=1 // loop_header
      %s18 = sphi 0, %s22
      %p19 = scmp.ge.s32.totalorder %s18, 6
      %s25 = sphi 0, %s58
      %s26 = sphi 0, %s54
      %s27 = sphi 0, %s50
      %s28 = sphi 0, %s46
      %s29 = sphi 0, %s42
      %s30 = sphi 0, %s25
      %s31 = sphi 0, %s26
      %s32 = sphi 0, %s27
      %s33 = sphi 0, %s28
      %s34 = sphi 0, %s29
      %s35 = sphi 0, %s30
      %s36 = sphi 0, %s31
      %s37 = sphi 0, %s32
      %s38 = sphi 0, %s33
      %s39 = sphi 0, %s34
      %s65 = sphi 0, %s67
      %s68 = sphi 0, %s65
      %s69 = sphi 0, %s68
      %s85 = sphi 0, %s69
      %s95 = sphi 0, %s97
      %s98 = sphi 0, %s95
      %s99 = sphi 0, %s98
      %s115 = sphi 0, %s99
      %s123 = sphi 0, %s125
      %s126 = sphi 0, %s123
      %s127 = sphi 0, %s126
      %s143 = sphi 0, %s127
      %s157 = sphi 0, %s159
      %s160 = sphi 0, %s157
      %s161 = sphi 0, %s160
      %s177 = sphi 0, %s161
    $region4: #{tpu_custom_call.1} parent=1 // loop_header_branch
      %21 = sbr.rel (%p19) target = $region8
    $region5: #{tpu_custom_call.1} parent=1 // loop_body
      %s23 = ssub.s32 %s18, 1
      %s24 = ssub.s32 %s18, 2
      %s40 = sadd.s32 1, %s29
      %p41 = scmp.ge.s32.totalorder %s40, 1
      %s42 = scalar_select %p41, 0, %s40
      %s43 = sadd.s32 1, %s28
      %s44 = scalar_select %p41, %s43, %s28
      %p45 = scmp.ge.s32.totalorder %s44, 1
      %s46 = scalar_select %p45, 0, %s44
      %s47 = sadd.s32 1, %s27
      %s48 = scalar_select %p45, %s47, %s27
      %p49 = scmp.ge.s32.totalorder %s48, 1
      %s50 = scalar_select %p49, 0, %s48
      %s51 = sadd.s32 1, %s26
      %s52 = scalar_select %p49, %s51, %s26
      %p53 = scmp.ge.s32.totalorder %s52, 2
      %s54 = scalar_select %p53, 0, %s52
      %s55 = sadd.s32 1, %s25
      %s56 = scalar_select %p53, %s55, %s25
      %p57 = scmp.ge.s32.totalorder %s56, 2
      %s58 = scalar_select %p57, 0, %s56
      %s59 = ssub.s32 %s26, %s54
      %s60 = ssub.s32 %s27, %s50
      %s61 = sor.u32 %s59, %s60
      %s62 = ssub.s32 %s29, %s42
      %s63 = sor.u32 %s61, %s62
      %p64 = scmp.eq.s32.totalorder %s63, 0
      %s66 = sadd.s32 %s65, 1
      %s67 = scalar_select %p64, %s65, %s66
      %p70 = pneg %p64
      %p71 = scmp.eq.s32.totalorder %s18, 3
      %p72 = por %p70, %p71
      %p73 = scmp.ne.s32.totalorder %s65, %s68
      %p74 = scmp.eq.s32.totalorder %s18, 0
      %p75 = por %p73, %p74
      %p76 = scmp.ne.s32.totalorder %s65, %s68
      %p77 = scmp.eq.s32.totalorder %s23, 3
      %p78 = por %p76, %p77
      %p79 = scmp.ne.s32.totalorder %s68, %s69
      %p80 = scmp.eq.s32.totalorder %s23, 0
      %p81 = por %p79, %p80
      %p82 = scmp.ne.s32.totalorder %s68, %s69
      %p83 = scmp.eq.s32.totalorder %s24, 3
      %p84 = por %p82, %p83
      %p86 = scmp.ne.s32.totalorder %s69, %s85
      %p87 = scmp.eq.s32.totalorder %s24, 0
      %p88 = por %p86, %p87
      %s89 = ssub.s32 %s25, %s58
      %s90 = ssub.s32 %s28, %s46
      %s91 = sor.u32 %s89, %s90
      %s92 = ssub.s32 %s29, %s42
      %s93 = sor.u32 %s91, %s92
      %p94 = scmp.eq.s32.totalorder %s93, 0
      %s96 = sadd.s32 %s95, 1
      %s97 = scalar_select %p94, %s95, %s96
      %p100 = pneg %p94
      %p101 = scmp.eq.s32.totalorder %s18, 3
      %p102 = por %p100, %p101
      %p103 = scmp.ne.s32.totalorder %s95, %s98
      %p104 = scmp.eq.s32.totalorder %s18, 0
      %p105 = por %p103, %p104
      %p106 = scmp.ne.s32.totalorder %s95, %s98
      %p107 = scmp.eq.s32.totalorder %s23, 3
      %p108 = por %p106, %p107
      %p109 = scmp.ne.s32.totalorder %s98, %s99
      %p110 = scmp.eq.s32.totalorder %s23, 0
      %p111 = por %p109, %p110
      %p112 = scmp.ne.s32.totalorder %s98, %s99
      %p113 = scmp.eq.s32.totalorder %s24, 3
      %p114 = por %p112, %p113
      %p116 = scmp.ne.s32.totalorder %s99, %s115
      %p117 = scmp.eq.s32.totalorder %s24, 0
      %p118 = por %p116, %p117
      %s119 = ssub.s32 %s25, %s58
      %s120 = ssub.s32 %s28, %s46
      %s121 = sor.u32 %s119, %s120
      %p122 = scmp.eq.s32.totalorder %s121, 0
      %s124 = sadd.s32 %s123, 1
      %s125 = scalar_select %p122, %s123, %s124
      %p128 = pneg %p122
      %p129 = scmp.eq.s32.totalorder %s18, 3
      %p130 = por %p128, %p129
      %p131 = scmp.ne.s32.totalorder %s123, %s126
      %p132 = scmp.eq.s32.totalorder %s18, 0
      %p133 = por %p131, %p132
      %p134 = scmp.ne.s32.totalorder %s123, %s126
      %p135 = scmp.eq.s32.totalorder %s23, 3
      %p136 = por %p134, %p135
      %p137 = scmp.ne.s32.totalorder %s126, %s127
      %p138 = scmp.eq.s32.totalorder %s23, 0
      %p139 = por %p137, %p138
      %p140 = scmp.ne.s32.totalorder %s126, %s127
      %p141 = scmp.eq.s32.totalorder %s24, 3
      %p142 = por %p140, %p141
      %p144 = scmp.ne.s32.totalorder %s127, %s143
      %p145 = scmp.eq.s32.totalorder %s24, 0
      %p146 = por %p144, %p145
      %s147 = smul.u32 %s25, 2
      %s148 = sadd.s32 %s147, %s26
      %s149 = smul.u32 %s58, 2
      %s150 = sadd.s32 %s149, %s54
      %s151 = ssub.s32 %s148, %s150
      %s152 = ssub.s32 %s27, %s50
      %s153 = sor.u32 %s151, %s152
      %s154 = ssub.s32 %s28, %s46
      %s155 = sor.u32 %s153, %s154
      %p156 = scmp.eq.s32.totalorder %s155, 0
      %s158 = sadd.s32 %s157, 1
      %s159 = scalar_select %p156, %s157, %s158
      %p162 = pneg %p156
      %p163 = scmp.eq.s32.totalorder %s18, 3
      %p164 = por %p162, %p163
      %p165 = scmp.ne.s32.totalorder %s157, %s160
      %p166 = scmp.eq.s32.totalorder %s18, 0
      %p167 = por %p165, %p166
      %p168 = scmp.ne.s32.totalorder %s157, %s160
      %p169 = scmp.eq.s32.totalorder %s23, 3
      %p170 = por %p168, %p169
      %p171 = scmp.ne.s32.totalorder %s160, %s161
      %p172 = scmp.eq.s32.totalorder %s23, 0
      %p173 = por %p171, %p172
      %p174 = scmp.ne.s32.totalorder %s160, %s161
      %p175 = scmp.eq.s32.totalorder %s24, 3
      %p176 = por %p174, %p175
      %p178 = scmp.ne.s32.totalorder %s161, %s177
      %p179 = scmp.eq.s32.totalorder %s24, 0
      %p180 = por %p178, %p179
      %p181 = scmp.le.s32.totalorder 1, %s18
      %p182 = scmp.lt.s32.totalorder %s18, 5
      %p183 = pnand %p181, %p182
      %p184 = pneg %p183
      // Predicated region
      $region9: #{tpu_custom_call.1} parent=5 // pred_check
        _
      $region10: #{tpu_custom_call.1} parent=5 // pred_check_branch
        %186 = sbr.rel (%p183) target = $region12
      $region11: #{tpu_custom_call.1} parent=5 // pred_region
        %s187 = ssub.s32 %s18, 1
      $region12: #{tpu_custom_call.1} parent=5 // pred_fallthru
        _
      %p188 = scmp.lt.s32.totalorder %s18, 4
      // Predicated region
      $region13: #{tpu_custom_call.1} parent=5 // pred_check
        %p189 = pneg %p188
      $region14: #{tpu_custom_call.1} parent=5 // pred_check_branch
        %191 = sbr.rel (%p189) target = $region16
      $region15: #{tpu_custom_call.1} parent=5 // pred_region
        // Predicated region
        $region17: #{tpu_custom_call.1} parent=15 // pred_check
          %p192 = pneg %p75
        $region18: #{tpu_custom_call.1} parent=15 // pred_check_branch
          %194 = sbr.rel (%p192) target = $region20
        $region19: #{tpu_custom_call.1} parent=15 // pred_region
          %s195 = sand.u32 %s65, 1
          %s196 = scalar_lea.sflag [#allocation4], %s195
          %s197 = sand.u32 %s65, 1
          %s198 = smul.addr %s197, 4
          %s199 = scalar_lea.vmem [#allocation3], %s198
          %s201 = ssub.s32 64, 64
          %202 = vsyncadd %s196, %s201
          %s203 = sadd.s32 %s29, %s27
          %s204 = sadd.s32 %s203, %s26
          %s205 = smul.addr %s204, 64
          %s206 = scalar_lea.hbm %s0, %s205
          %s208 = sshll.u32 %s199, 4
          %s209 = int_to_ptr.vmem [resolvable:$true] %s208
          %211 = dma.hbm_to_vmem [thread:$0]  %s206, 64, %s209, %s196
        $region20: #{tpu_custom_call.1} parent=15 // pred_fallthru
          _
        // Predicated region
        $region21: #{tpu_custom_call.1} parent=15 // pred_check
          %p212 = pneg %p105
        $region22: #{tpu_custom_call.1} parent=15 // pred_check_branch
          %214 = sbr.rel (%p212) target = $region24
        $region23: #{tpu_custom_call.1} parent=15 // pred_region
          %s215 = sand.u32 %s95, 1
          %s216 = scalar_lea.sflag [#allocation7], %s215
          %s217 = sand.u32 %s95, 1
          %s218 = smul.addr %s217, 8
          %s219 = scalar_lea.vmem [#allocation6], %s218
          %s220 = smul.u32 2, %s28
          %s222 = ssub.s32 128, 128
          %223 = vsyncadd %s216, %s222
          %s224 = sadd.s32 %s29, %s220
          %s225 = smul.addr %s25, 2
          %s226 = sadd.s32 %s224, %s225
          %s227 = smul.addr %s226, 64
          %s228 = scalar_lea.hbm %s1, %s227
          %s229 = sshll.u32 %s219, 4
          %s230 = int_to_ptr.vmem [resolvable:$true] %s229
          %235 = dma.hbm_to_vmem [thread:$0]  %s228, 128, %s230, %s216, 64, 64, 4
        $region24: #{tpu_custom_call.1} parent=15 // pred_fallthru
          _
        // Predicated region
        $region25: #{tpu_custom_call.1} parent=15 // pred_check
          %p236 = pneg %p133
        $region26: #{tpu_custom_call.1} parent=15 // pred_check_branch
          %238 = sbr.rel (%p236) target = $region28
        $region27: #{tpu_custom_call.1} parent=15 // pred_region
          %p239 = scmp.lt.s32.totalorder %s25, 1
          %s240 = scalar_select %p239, %s25, 1
          %p241 = scmp.lt.s32.totalorder %s28, 0
          %s242 = scalar_select %p241, %s28, 0
          %s243 = sadd.s32 %s242, %s240
          %s244 = scalar_lea.vmem %s2, %s243
        $region28: #{tpu_custom_call.1} parent=15 // pred_fallthru
          _
      $region16: #{tpu_custom_call.1} parent=5 // pred_fallthru
        _
      %p245 = scmp.le.s32.totalorder 1, %s18
      %p246 = scmp.lt.s32.totalorder %s18, 5
      %p247 = pnand %p245, %p246
      %p248 = pneg %p247
      // Predicated region
      $region29: #{tpu_custom_call.1} parent=5 // pred_check
        _
      $region30: #{tpu_custom_call.1} parent=5 // pred_check_branch
        %250 = sbr.rel (%p247) target = $region32
      $region31: #{tpu_custom_call.1} parent=5 // pred_region
        %s251 = ssub.s32 %s18, 1
        %s252 = sand.u32 %s68, 1
        %s253 = scalar_lea.sflag [#allocation4], %s252
        %s254 = sand.u32 %s68, 1
        %s255 = smul.addr %s254, 4
        %s256 = scalar_lea.vmem [#allocation3], %s255
        // Predicated region
        $region33: #{tpu_custom_call.1} parent=31 // pred_check
          %p257 = pneg %p81
        $region34: #{tpu_custom_call.1} parent=31 // pred_check_branch
          %259 = sbr.rel (%p257) target = $region36
        $region35: #{tpu_custom_call.1} parent=31 // pred_region
          %260 = dma.done %s253, 64
        $region36: #{tpu_custom_call.1} parent=31 // pred_fallthru
          _
        %s261 = sand.u32 %s98, 1
        %s262 = scalar_lea.sflag [#allocation7], %s261
        %s263 = sand.u32 %s98, 1
        %s264 = smul.addr %s263, 8
        %s265 = scalar_lea.vmem [#allocation6], %s264
        // Predicated region
        $region37: #{tpu_custom_call.1} parent=31 // pred_check
          %p266 = pneg %p111
        $region38: #{tpu_custom_call.1} parent=31 // pred_check_branch
          %268 = sbr.rel (%p266) target = $region40
        $region39: #{tpu_custom_call.1} parent=31 // pred_region
          %269 = dma.done %s262, 128
        $region40: #{tpu_custom_call.1} parent=31 // pred_fallthru
          _
        %s270 = sand.u32 %s68, 1
        %s271 = scalar_lea.sflag [#allocation4], %s270
        %s272 = sand.u32 %s68, 1
        %s273 = smul.addr %s272, 4
        %s274 = scalar_lea.vmem [#allocation3], %s273
        %p275 = pneg %p81
        %p276 = pneg %p78
        %s277 = sand.u32 %s98, 1
        %s278 = scalar_lea.sflag [#allocation7], %s277
        %s279 = sand.u32 %s98, 1
        %s280 = smul.addr %s279, 8
        %s281 = scalar_lea.vmem [#allocation6], %s280
        %p282 = pneg %p111
        %p283 = pneg %p108
        %p284 = scmp.lt.s32.totalorder %s30, 1
        %s285 = scalar_select %p284, %s30, 1
        %p286 = scmp.lt.s32.totalorder %s33, 0
        %s287 = scalar_select %p286, %s33, 0
        %s288 = sadd.s32 %s287, %s285
        %s289 = scalar_lea.vmem %s2, %s288
        %p290 = pneg %p139
        %p291 = pneg %p136
        %p292 = pneg %p173
        %p293 = pneg %p170
        %s294 = sand.u32 %s160, 1
        %s295 = scalar_lea.sflag [#allocation5], %s294
        %s296 = sand.u32 %s160, 1
        %s297 = smul.addr %s296, 8
        %s298 = scalar_lea.vmem [#allocation8], %s297
        %s299 = smul.u32 2, %s33
        %p300 = scmp.lt.s32.totalorder %s30, 1
        %s301 = scalar_select %p300, %s30, 1
        %p302 = scmp.lt.s32.totalorder %s33, 0
        %s303 = scalar_select %p302, %s33, 0
        %s304 = sadd.s32 %s303, %s301
        %s305 = scalar_lea.vmem %s2, %s304
        %s306 = smul.u32 %s30, 2
        %s307 = sadd.s32 %s306, %s31
        %p309 = scmp.eq.s32.totalorder %s34, 0
        // Predicated region
        $region41: #{tpu_custom_call.1} parent=31 // pred_check
          %p310 = pneg %p309
        $region42: #{tpu_custom_call.1} parent=31 // pred_check_branch
          %312 = sbr.rel (%p310) target = $region44
        $region43: #{tpu_custom_call.1} parent=31 // pred_region
          %v313 = vld [vmem:[%s305] sm:$0x1]
          %v315 = vlaneseq
          %v316 = vshrl.u32 %v315, 7
          %v317 = vsub.s32 0, %v316
          %v318 = vrot.slane %v313, %v317
          %vm320 = vcmask 130048
          %321 = vst.msk [vmem:[#allocation2] sm:$0xff] %vm320, %v318
        $region44: #{tpu_custom_call.1} parent=31 // pred_fallthru
          _
        %v322 = vld [vmem:[#allocation2] sm:$0xff]
        %v323 = vld [vmem:[%s256] sm:$0xf]
        %v324 = vld [vmem:[%s265] sm:$0xf]
        %v325 = vld [vmem:[%s265 + $0x4] sm:$0xf]
        %v328 = vunpack.c.l.b16 %v324
        %v329 = vunpack.c.l.b16 %v325
        %v330 = vpack.c.b16 %v329, %v328
        %vm331 = vcmask 261120
        %v333 = vsel %vm331, %v323, 0
        %v336 = vsel %vm331, %v330, 0
        %338 = vmatprep.subr.bf16.mxu0 0
        %339 = vmatpush1.bf16.xpose.msra.mxu0 %v336
        %340 = vmatprep.subr.bf16.mxu0 0
        %341 = vmatpush1.bf16.xpose.msra.mxu0 0
        %342 = vmatprep.subr.bf16.mxu0 0
        %343 = vmatpush1.bf16.xpose.msra.mxu0 0
        %344 = vmatprep.subr.bf16.mxu0 0
        %345 = vmatpush1.bf16.xpose.msra.mxu0 0
        %346 = vmatprep.subr.bf16.mxu0 0
        %347 = vmatpush1.bf16.xpose.msra.mxu0 0
        %348 = vmatprep.subr.bf16.mxu0 0
        %349 = vmatpush1.bf16.xpose.msra.mxu0 0
        %350 = vmatprep.subr.bf16.mxu0 0
        %351 = vmatpush1.bf16.xpose.msra.mxu0 0
        %352 = vmatprep.subr.bf16.mxu0 0
        %353 = vmatpush1.bf16.xpose.msra.mxu0 0
        %354 = vmatprep.subr.bf16.mxu0 0
        %355 = vmatpush1.bf16.xpose.msra.mxu0 0
        %356 = vmatprep.subr.bf16.mxu0 0
        %357 = vmatpush1.bf16.xpose.msra.mxu0 0
        %358 = vmatprep.subr.bf16.mxu0 0
        %359 = vmatpush1.bf16.xpose.msra.mxu0 0
        %360 = vmatprep.subr.bf16.mxu0 0
        %361 = vmatpush1.bf16.xpose.msra.mxu0 0
        %362 = vmatprep.subr.bf16.mxu0 0
        %363 = vmatpush1.bf16.xpose.msra.mxu0 0
        %364 = vmatprep.subr.bf16.mxu0 0
        %365 = vmatpush1.bf16.xpose.msra.mxu0 0
        %366 = vmatprep.subr.bf16.mxu0 0
        %367 = vmatpush1.bf16.xpose.msra.mxu0 0
        %368 = vmatprep.subr.bf16.mxu0 0
        %369 = vmatpush1.bf16.xpose.msra.mxu0 0
        %370 = vmatprep.mubr.bf16.mxu0 0
        %371 = vmatmul.mubr.bf16.gmra.mrb[0].mxu0 %v333
        %v372 = vpop.f32.mrb[0].mxu0
        %v373 = vadd.f32 0.0, %v372
        %v374 = vpop.f32.mrb[0].mxu0
        %v375 = vpop.f32.mrb[0].mxu0
        %v376 = vpop.f32.mrb[0].mxu0
        %377 = vdwg.mxu0
        %v378 = vadd.f32 %v322, %v373
        %vm379 = vcmask 130048
        %380 = vst.msk [vmem:[#allocation2] sm:$0xff] %vm379, %v378
        // Predicated region
        $region45: #{tpu_custom_call.1} parent=31 // pred_check
          %p381 = pneg %p309
        $region46: #{tpu_custom_call.1} parent=31 // pred_check_branch
          %383 = sbr.rel (%p381) target = $region48
        $region47: #{tpu_custom_call.1} parent=31 // pred_region
          %v384 = vld [vmem:[#allocation2] sm:$0xff]
          %385 = vst.msk [vmem:[%s298] sm:$0xff] %vm379, %v384
        $region48: #{tpu_custom_call.1} parent=31 // pred_fallthru
          _
        %s386 = sand.u32 %s160, 1
        %s387 = scalar_lea.sflag [#allocation5], %s386
        %s388 = sand.u32 %s160, 1
        %s389 = smul.addr %s388, 8
        %s390 = scalar_lea.vmem [#allocation8], %s389
        // Predicated region
        $region49: #{tpu_custom_call.1} parent=31 // pred_check
          %p391 = pneg %p170
        $region50: #{tpu_custom_call.1} parent=31 // pred_check_branch
          %393 = sbr.rel (%p391) target = $region52
        $region51: #{tpu_custom_call.1} parent=31 // pred_region
          %s394 = smul.u32 %s30, 2
          %s395 = sadd.s32 %s394, %s31
          %s397 = ssub.s32 128, 128
          %398 = vsyncadd %s387, %s397
          %s399 = sadd.s32 %s33, %s32
          %s400 = sadd.s32 %s399, %s395
          %s401 = smul.addr %s400, 128
          %s402 = scalar_lea.hbm %s3, %s401
          %s404 = sshll.u32 %s390, 4
          %s405 = int_to_ptr.vmem [resolvable:$true] %s404
          %407 = dma.vmem_to_hbm [thread:$0]  %s405, 128, %s402, %s387
        $region52: #{tpu_custom_call.1} parent=31 // pred_fallthru
          _
      $region32: #{tpu_custom_call.1} parent=5 // pred_fallthru
        _
      %p408 = scmp.le.s32.totalorder 2, %s18
      // Predicated region
      $region53: #{tpu_custom_call.1} parent=5 // pred_check
        %p409 = pneg %p408
      $region54: #{tpu_custom_call.1} parent=5 // pred_check_branch
        %411 = sbr.rel (%p409) target = $region56
      $region55: #{tpu_custom_call.1} parent=5 // pred_region
        %s412 = ssub.s32 %s18, 2
        // Predicated region
        $region57: #{tpu_custom_call.1} parent=55 // pred_check
          %p413 = pneg %p176
        $region58: #{tpu_custom_call.1} parent=55 // pred_check_branch
          %415 = sbr.rel (%p413) target = $region60
        $region59: #{tpu_custom_call.1} parent=55 // pred_region
          %s416 = sand.u32 %s161, 1
          %s417 = scalar_lea.sflag [#allocation5], %s416
          %s418 = sand.u32 %s161, 1
          %s419 = smul.addr %s418, 8
          %s420 = scalar_lea.vmem [#allocation8], %s419
          %421 = dma.done %s417, 128
        $region60: #{tpu_custom_call.1} parent=55 // pred_fallthru
          _
      $region56: #{tpu_custom_call.1} parent=5 // pred_fallthru
        _
    $region6: #{tpu_custom_call.1} parent=1 // loop_footer
      %s22 = sadd.s32 1, %s18
    $region7: #{tpu_custom_call.1} parent=1 // loop_footer_branch
      %17 = sbr.rel target = $region3
    $region8: #{tpu_custom_call.1} parent=1 // loop_exit
      _
    %422 = vsyncpa [#allocation4], 1
    %s423 = scalar_lea.sflag [#allocation4], 1
    %424 = vsyncpa %s423, 1
    %425 = vsyncpa [#allocation7], 1
    %s426 = scalar_lea.sflag [#allocation7], 1
    %427 = vsyncpa %s426, 1
    %428 = vsyncpa [#allocation5], 1
    %s429 = scalar_lea.sflag [#allocation5], 1
    %430 = vsyncpa %s429, 1

</llo_original>
